<compile_context>
chip_gen: v7x
topology: tpu7x:2x2x1
jax: 0.10.0
libtpu: 0.0.40
codegen_flags: <defaults>
</compile_context>

<pallas_src>
import math
from functools import partial

import jax
import jax.numpy as jnp
from jax.experimental import pallas as pl
from jax.experimental.pallas import tpu as pltpu


def _round_up(n, m):
    return ((n + m - 1) // m) * m


def _mlp_kernel(*refs, num_layers):
    # refs = (x_ref, w0_ref, ..., w{L-1}_ref, out_ref); scales are pre-folded
    # into the (padded, transposed) weights on the host.
    x_ref = refs[0]
    w_refs = refs[1:1 + num_layers]
    o_ref = refs[-1]

    h = x_ref[...]
    for i in range(num_layers):
        h = jnp.dot(h, w_refs[i][...], preferred_element_type=jnp.float32)
        if i < num_layers - 1:           # ReLU on all but the last layer
            h = jnp.maximum(h, 0.0)
    o_ref[...] = h.astype(o_ref.dtype)


@partial(jax.jit, static_argnames=("layer_sizes", "batch_tile"))
def mlp_forward(x, weights_t, layer_sizes, *, batch_tile=256):
    """x: (B, layer_sizes[0]) f32; weights_t[i]: (layer_sizes[i], layer_sizes[i+1])."""
    layer_sizes = tuple(int(d) for d in layer_sizes)
    num_layers = len(weights_t)
    batch = x.shape[0]
    dims = list(layer_sizes)
    pdims = [_round_up(d, 128) for d in dims]        # lane-dense feature dims

    # Per-layer scale sqrt(2)/sqrt(in_dim), folded into the weights (scale>0
    # commutes with ReLU).  Weights are also zero-padded to 128-multiples.
    w_padded = []
    for i, w in enumerate(weights_t):
        scale = math.sqrt(2.0) / math.sqrt(float(layer_sizes[i]))
        wp = jnp.zeros((pdims[i], pdims[i + 1]), dtype=jnp.float32)
        wp = wp.at[:dims[i], :dims[i + 1]].set(w.astype(jnp.float32) * scale)
        w_padded.append(wp)

    # Batch tiling: tile must be a multiple of 8 (sublanes) and no larger than
    # the padded batch.
    tb = max(8, min(batch_tile, _round_up(batch, 8)))
    tb = _round_up(tb, 8)
    b_pad = _round_up(batch, tb)
    xp = jnp.zeros((b_pad, pdims[0]), dtype=jnp.float32)
    xp = xp.at[:batch, :dims[0]].set(x.astype(jnp.float32))

    grid = (b_pad // tb,)
    in_specs = [pl.BlockSpec((tb, pdims[0]), lambda i: (i, 0))]
    for wp in w_padded:
        # Same block index every grid step -> weight blocks stay VMEM-resident.
        in_specs.append(pl.BlockSpec(wp.shape, lambda i: (0, 0)))
    out_specs = pl.BlockSpec((tb, pdims[-1]), lambda i: (i, 0))

    # Advisory cost estimate for the XLA scheduler.
    flops = 2 * b_pad * sum(pdims[i] * pdims[i + 1] for i in range(num_layers))
    bytes_accessed = 4 * (b_pad * pdims[0] + b_pad * pdims[-1]
                          + sum(pdims[i] * pdims[i + 1] for i in range(num_layers)))
    ce = pl.CostEstimate(flops=flops, transcendentals=0,
                         bytes_accessed=bytes_accessed)

    kernel = partial(_mlp_kernel, num_layers=num_layers)
    out_padded = pl.pallas_call(
        kernel,
        out_shape=jax.ShapeDtypeStruct((b_pad, pdims[-1]), jnp.float32),
        grid=grid,
        in_specs=in_specs,
        out_specs=out_specs,
        compiler_params=pltpu.CompilerParams(
            dimension_semantics=("parallel",)),
        cost_estimate=ce,
    )(xp, *w_padded)

    # Slice the real (batch, out_dim) result back out of the padded slab.
    return out_padded[:batch, :dims[-1]]


def mlp_reference(x, weights_t, layer_sizes):
    h = x
    num_layers = len(weights_t)
    for i in range(num_layers):
        y = h @ weights_t[i]
        if i < num_layers - 1:
            y = jnp.maximum(y, 0.0)
        h = y * (math.sqrt(2.0) / math.sqrt(float(layer_sizes[i])))
    return h


if __name__ == "__main__":
    # Small shapes consistent with the module: an MLP over feature vectors.
    layer_sizes = (32, 64, 64, 16)
    batch = 16

    key = jax.random.PRNGKey(0)
    kx, *kws = jax.random.split(key, 1 + len(layer_sizes) - 1)

    x = jax.random.normal(kx, (batch, layer_sizes[0]), dtype=jnp.float32)

    # nn.init.normal_ -> standard normal weights; torch weight is (out, in),
    # we store the transpose (in, out) so the kernel does h @ W.
    weights_t = []
    for i, kw in enumerate(kws):
        w = jax.random.normal(kw, (layer_sizes[i + 1], layer_sizes[i]),
                              dtype=jnp.float32)
        weights_t.append(w.T)

    out = mlp_forward(x, weights_t, layer_sizes)
    out = jax.block_until_ready(out)

    ref = mlp_reference(x, weights_t, layer_sizes)
    assert out.shape == (batch, layer_sizes[-1])
    assert jnp.allclose(out, ref, atol=1e-4, rtol=1e-4), "mismatch vs reference"

    print("KERNEL_OK")
</pallas_src>

<mosaic_0001>
module attributes {stable_mosaic.version = 11 : i64} {
  func.func @_mlp_kernel(%arg0: i32, %arg1: memref<16x128xf32, #tpu.memory_space<vmem>>, %arg2: memref<128x128xf32, #tpu.memory_space<vmem>>, %arg3: memref<128x128xf32, #tpu.memory_space<vmem>>, %arg4: memref<128x128xf32, #tpu.memory_space<vmem>>, %arg5: memref<16x128xf32, #tpu.memory_space<vmem>>) attributes {dimension_semantics = [#tpu.dimension_semantics<parallel>], iteration_bounds = array<i64: 1>, scalar_prefetch = 0 : i64, scratch_operands = 0 : i64, tpu.core_type = #tpu.core_type<tc>, window_params = [{transform_indices = @transform_0, window_bounds = array<i64: 16, 128>}, {pipeline_mode = #tpu.pipeline_mode<synchronous>, transform_indices = @transform_1, window_bounds = array<i64: 128, 128>}, {pipeline_mode = #tpu.pipeline_mode<synchronous>, transform_indices = @transform_2, window_bounds = array<i64: 128, 128>}, {pipeline_mode = #tpu.pipeline_mode<synchronous>, transform_indices = @transform_3, window_bounds = array<i64: 128, 128>}, {transform_indices = @transform_4, window_bounds = array<i64: 16, 128>}]} {
    %c0 = arith.constant 0 : index
    %c0_0 = arith.constant 0 : index
    %0 = vector.load %arg1[%c0, %c0_0] : memref<16x128xf32, #tpu.memory_space<vmem>>, vector<16x128xf32>
    %c0_1 = arith.constant 0 : index
    %c0_2 = arith.constant 0 : index
    %1 = vector.load %arg2[%c0_1, %c0_2] : memref<128x128xf32, #tpu.memory_space<vmem>>, vector<128x128xf32>
    %cst = arith.constant dense<0.000000e+00> : vector<16x128xf32>
    %2 = tpu.matmul %0, %1, %cst {dimension_numbers = #tpu.dot_dimension_numbers<[1], [0], [0], [1], [0, 0, 1, 1], [], []>} : vector<16x128xf32>, vector<128x128xf32>, vector<16x128xf32> -> vector<16x128xf32>
    %cst_3 = arith.constant 0.000000e+00 : f32
    %3 = vector.broadcast %cst_3 : f32 to vector<16x128xf32>
    %4 = arith.maximumf %2, %3 : vector<16x128xf32>
    %c0_4 = arith.constant 0 : index
    %c0_5 = arith.constant 0 : index
    %5 = vector.load %arg3[%c0_4, %c0_5] : memref<128x128xf32, #tpu.memory_space<vmem>>, vector<128x128xf32>
    %cst_6 = arith.constant dense<0.000000e+00> : vector<16x128xf32>
    %6 = tpu.matmul %4, %5, %cst_6 {dimension_numbers = #tpu.dot_dimension_numbers<[1], [0], [0], [1], [0, 0, 1, 1], [], []>} : vector<16x128xf32>, vector<128x128xf32>, vector<16x128xf32> -> vector<16x128xf32>
    %cst_7 = arith.constant 0.000000e+00 : f32
    %7 = vector.broadcast %cst_7 : f32 to vector<16x128xf32>
    %8 = arith.maximumf %6, %7 : vector<16x128xf32>
    %c0_8 = arith.constant 0 : index
    %c0_9 = arith.constant 0 : index
    %9 = vector.load %arg4[%c0_8, %c0_9] : memref<128x128xf32, #tpu.memory_space<vmem>>, vector<128x128xf32>
    %cst_10 = arith.constant dense<0.000000e+00> : vector<16x128xf32>
    %10 = tpu.matmul %8, %9, %cst_10 {dimension_numbers = #tpu.dot_dimension_numbers<[1], [0], [0], [1], [0, 0, 1, 1], [], []>} : vector<16x128xf32>, vector<128x128xf32>, vector<16x128xf32> -> vector<16x128xf32>
    %c0_11 = arith.constant 0 : index
    %c0_12 = arith.constant 0 : index
    %11 = vector.load %arg5[%c0_11, %c0_12] : memref<16x128xf32, #tpu.memory_space<vmem>>, vector<16x128xf32>
    tpu.vector_store %arg5[%c0_11, %c0_12], %10 {strides = array<i32>} : memref<16x128xf32, #tpu.memory_space<vmem>>, vector<16x128xf32>,
    return
  }
  func.func @transform_0(%arg0: i32) -> (i32, i32) {
    %c0_i32 = arith.constant 0 : i32
    %c0_i32_0 = arith.constant 0 : i32
    return %arg0, %c0_i32 : i32, i32
  }
  func.func @transform_1(%arg0: i32) -> (i32, i32) {
    %c0_i32 = arith.constant 0 : i32
    %c0_i32_0 = arith.constant 0 : i32
    %c0_i32_1 = arith.constant 0 : i32
    return %c0_i32, %c0_i32_0 : i32, i32
  }
  func.func @transform_2(%arg0: i32) -> (i32, i32) {
    %c0_i32 = arith.constant 0 : i32
    %c0_i32_0 = arith.constant 0 : i32
    %c0_i32_1 = arith.constant 0 : i32
    return %c0_i32, %c0_i32_0 : i32, i32
  }
  func.func @transform_3(%arg0: i32) -> (i32, i32) {
    %c0_i32 = arith.constant 0 : i32
    %c0_i32_0 = arith.constant 0 : i32
    %c0_i32_1 = arith.constant 0 : i32
    return %c0_i32, %c0_i32_0 : i32, i32
  }
  func.func @transform_4(%arg0: i32) -> (i32, i32) {
    %c0_i32 = arith.constant 0 : i32
    %c0_i32_0 = arith.constant 0 : i32
    return %arg0, %c0_i32 : i32, i32
  }
}

</mosaic_0001>

<llo_original>
// kernel: mlp_forward.1
$region0: #{mlp_forward.1}
  #allocation0 [shape = 'u32[]', space=smem, size = 0x4, offset = 0x4, fixed_abs, tag = 'smem constant byte address 0x4 - core index']
  #allocation1 [shape = 'u32[144,128]{1,0:T(1,128)}', space=vmem, size = 0x12000, scoped, tag = 'internal scratch']
  %s0 = inlined_call_operand.vmem [shape: f32[16,128], index: 0, kind: input, shape index: {}]
  %s1 = inlined_call_operand.vmem [shape: f32[128,128], index: 1, kind: input, shape index: {}]
  %s2 = inlined_call_operand.vmem [shape: f32[128,128], index: 2, kind: input, shape index: {}]
  %s3 = inlined_call_operand.vmem [shape: f32[128,128], index: 3, kind: input, shape index: {}]
  %s4 = inlined_call_operand.hbm [shape: f32[16,128], index: 4, kind: output, shape index: {}]
  %s5 = sld [smem:[#allocation0]]
  $region26: #{mlp_forward.1} parent=0
    _
  %s7 = ssub.s32 1, %s5
  %s8 = scalar_select 0, %s7, %s5
  $region1: #{mlp_forward.1} parent=0
    #allocation2 [shape = 'u8[8192]{0}', space=vmem, size = 0x2000, scoped, tag = 'output window, operand 0, single buffered']
    #allocation3 [shape = 's32[1]{0}', space=sflag, size = 0x4, scoped, tag = 'scoped memory for mlp_forward.1']
    %9 = vsyncpa [#allocation3], 0
    // Predicated region
    $region2: #{mlp_forward.1} parent=1 // pred_check
      _
    $region3: #{mlp_forward.1} parent=1 // pred_check_branch
      %11 = sbr.rel (0) target = $region5
    $region4: #{mlp_forward.1} parent=1 // pred_region
      _
    $region5: #{mlp_forward.1} parent=1 // pred_fallthru
      _
    // Predicated region
    $region6: #{mlp_forward.1} parent=1 // pred_check
      _
    $region7: #{mlp_forward.1} parent=1 // pred_check_branch
      %13 = sbr.rel (0) target = $region9
    $region8: #{mlp_forward.1} parent=1 // pred_region
      _
    $region9: #{mlp_forward.1} parent=1 // pred_fallthru
      _
    // Predicated region
    $region10: #{mlp_forward.1} parent=1 // pred_check
      _
    $region11: #{mlp_forward.1} parent=1 // pred_check_branch
      %15 = sbr.rel (0) target = $region13
    $region12: #{mlp_forward.1} parent=1 // pred_region
      _
    $region13: #{mlp_forward.1} parent=1 // pred_fallthru
      _
    // Predicated region
    $region14: #{mlp_forward.1} parent=1 // pred_check
      _
    $region15: #{mlp_forward.1} parent=1 // pred_check_branch
      %17 = sbr.rel (0) target = $region17
    $region16: #{mlp_forward.1} parent=1 // pred_region
      _
    $region17: #{mlp_forward.1} parent=1 // pred_fallthru
      _
    %v18 = vld [vmem:[%s0] sm:$0xff]
    %v19 = vld [vmem:[%s0 + $0x8] sm:$0xff]
    %v20 = vld [vmem:[%s1] sm:$0xff]
    %v21 = vld [vmem:[%s1 + $0x8] sm:$0xff]
    %v22 = vld [vmem:[%s1 + $0x10] sm:$0xff]
    %v23 = vld [vmem:[%s1 + $0x18] sm:$0xff]
    %v24 = vld [vmem:[%s1 + $0x20] sm:$0xff]
    %v25 = vld [vmem:[%s1 + $0x28] sm:$0xff]
    %v26 = vld [vmem:[%s1 + $0x30] sm:$0xff]
    %v27 = vld [vmem:[%s1 + $0x38] sm:$0xff]
    %v28 = vld [vmem:[%s1 + $0x40] sm:$0xff]
    %v29 = vld [vmem:[%s1 + $0x48] sm:$0xff]
    %v30 = vld [vmem:[%s1 + $0x50] sm:$0xff]
    %v31 = vld [vmem:[%s1 + $0x58] sm:$0xff]
    %v32 = vld [vmem:[%s1 + $0x60] sm:$0xff]
    %v33 = vld [vmem:[%s1 + $0x68] sm:$0xff]
    %v34 = vld [vmem:[%s1 + $0x70] sm:$0xff]
    %v35 = vld [vmem:[%s1 + $0x78] sm:$0xff]
    %36 = vmatprep.subr.mxu0 0.0
    %37 = vmatpush1.msra.mxu0 %v20
    %38 = vmatprep.subr.mxu0 0.0
    %39 = vmatpush1.msra.mxu0 %v21
    %40 = vmatprep.subr.mxu0 0.0
    %41 = vmatpush1.msra.mxu0 %v22
    %42 = vmatprep.subr.mxu0 0.0
    %43 = vmatpush1.msra.mxu0 %v23
    %44 = vmatprep.subr.mxu0 0.0
    %45 = vmatpush1.msra.mxu0 %v24
    %46 = vmatprep.subr.mxu0 0.0
    %47 = vmatpush1.msra.mxu0 %v25
    %48 = vmatprep.subr.mxu0 0.0
    %49 = vmatpush1.msra.mxu0 %v26
    %50 = vmatprep.subr.mxu0 0.0
    %51 = vmatpush1.msra.mxu0 %v27
    %52 = vmatprep.subr.mxu0 0.0
    %53 = vmatpush1.msra.mxu0 %v28
    %54 = vmatprep.subr.mxu0 0.0
    %55 = vmatpush1.msra.mxu0 %v29
    %56 = vmatprep.subr.mxu0 0.0
    %57 = vmatpush1.msra.mxu0 %v30
    %58 = vmatprep.subr.mxu0 0.0
    %59 = vmatpush1.msra.mxu0 %v31
    %60 = vmatprep.subr.mxu0 0.0
    %61 = vmatpush1.msra.mxu0 %v32
    %62 = vmatprep.subr.mxu0 0.0
    %63 = vmatpush1.msra.mxu0 %v33
    %64 = vmatprep.subr.mxu0 0.0
    %65 = vmatpush1.msra.mxu0 %v34
    %66 = vmatprep.subr.mxu0 0.0
    %67 = vmatpush1.msra.mxu0 %v35
    %68 = vmatprep.subr.mxu0 0.0
    %69 = vmatpush1.msra.mxu0 0.0
    %70 = vmatprep.subr.mxu0 0.0
    %71 = vmatpush1.msra.mxu0 0.0
    %72 = vmatprep.subr.mxu0 0.0
    %73 = vmatpush1.msra.mxu0 0.0
    %74 = vmatprep.subr.mxu0 0.0
    %75 = vmatpush1.msra.mxu0 0.0
    %76 = vmatprep.subr.mxu0 0.0
    %77 = vmatpush1.msra.mxu0 0.0
    %78 = vmatprep.subr.mxu0 0.0
    %79 = vmatpush1.msra.mxu0 0.0
    %80 = vmatprep.subr.mxu0 0.0
    %81 = vmatpush1.msra.mxu0 0.0
    %82 = vmatprep.subr.mxu0 0.0
    %83 = vmatpush1.msra.mxu0 0.0
    %84 = vmatprep.subr.mxu0 0.0
    %85 = vmatpush1.msra.mxu0 0.0
    %86 = vmatprep.subr.mxu0 0.0
    %87 = vmatpush1.msra.mxu0 0.0
    %88 = vmatprep.subr.mxu0 0.0
    %89 = vmatpush1.msra.mxu0 0.0
    %90 = vmatprep.subr.mxu0 0.0
    %91 = vmatpush1.msra.mxu0 0.0
    %92 = vmatprep.subr.mxu0 0.0
    %93 = vmatpush1.msra.mxu0 0.0
    %94 = vmatprep.subr.mxu0 0.0
    %95 = vmatpush1.msra.mxu0 0.0
    %96 = vmatprep.subr.mxu0 0.0
    %97 = vmatpush1.msra.mxu0 0.0
    %98 = vmatprep.subr.mxu0 0.0
    %99 = vmatpush1.msra.mxu0 0.0
    %100 = vmatprep.mubr.f32.mxu0 0.0
    %101 = vmatmul.mubr.f32.gmra.mrb[0].mxu0 %v18
    %v102 = vpop.f32.mrb[0].mxu0
    %v103 = vadd.f32 0.0, %v102
    %v104 = vpop.f32.mrb[0].mxu0
    %105 = vmatprep.mubr.f32.mxu0 0.0
    %106 = vmatmul.mubr.f32.gmra.mrb[0].mxu0 %v19
    %v107 = vpop.f32.mrb[0].mxu0
    %v108 = vadd.f32 0.0, %v107
    %v109 = vpop.f32.mrb[0].mxu0
    %110 = vdwg.mxu0
    %v111 = vmax.f32 %v103, 0.0
    %v112 = vmax.f32 %v108, 0.0
    %v113 = vld [vmem:[%s2] sm:$0xff]
    %v114 = vld [vmem:[%s2 + $0x8] sm:$0xff]
    %v115 = vld [vmem:[%s2 + $0x10] sm:$0xff]
    %v116 = vld [vmem:[%s2 + $0x18] sm:$0xff]
    %v117 = vld [vmem:[%s2 + $0x20] sm:$0xff]
    %v118 = vld [vmem:[%s2 + $0x28] sm:$0xff]
    %v119 = vld [vmem:[%s2 + $0x30] sm:$0xff]
    %v120 = vld [vmem:[%s2 + $0x38] sm:$0xff]
    %v121 = vld [vmem:[%s2 + $0x40] sm:$0xff]
    %v122 = vld [vmem:[%s2 + $0x48] sm:$0xff]
    %v123 = vld [vmem:[%s2 + $0x50] sm:$0xff]
    %v124 = vld [vmem:[%s2 + $0x58] sm:$0xff]
    %v125 = vld [vmem:[%s2 + $0x60] sm:$0xff]
    %v126 = vld [vmem:[%s2 + $0x68] sm:$0xff]
    %v127 = vld [vmem:[%s2 + $0x70] sm:$0xff]
    %v128 = vld [vmem:[%s2 + $0x78] sm:$0xff]
    %129 = vmatprep.subr.mxu0 0.0
    %130 = vmatpush1.msra.mxu0 %v113
    %131 = vmatprep.subr.mxu0 0.0
    %132 = vmatpush1.msra.mxu0 %v114
    %133 = vmatprep.subr.mxu0 0.0
    %134 = vmatpush1.msra.mxu0 %v115
    %135 = vmatprep.subr.mxu0 0.0
    %136 = vmatpush1.msra.mxu0 %v116
    %137 = vmatprep.subr.mxu0 0.0
    %138 = vmatpush1.msra.mxu0 %v117
    %139 = vmatprep.subr.mxu0 0.0
    %140 = vmatpush1.msra.mxu0 %v118
    %141 = vmatprep.subr.mxu0 0.0
    %142 = vmatpush1.msra.mxu0 %v119
    %143 = vmatprep.subr.mxu0 0.0
    %144 = vmatpush1.msra.mxu0 %v120
    %145 = vmatprep.subr.mxu0 0.0
    %146 = vmatpush1.msra.mxu0 %v121
    %147 = vmatprep.subr.mxu0 0.0
    %148 = vmatpush1.msra.mxu0 %v122
    %149 = vmatprep.subr.mxu0 0.0
    %150 = vmatpush1.msra.mxu0 %v123
    %151 = vmatprep.subr.mxu0 0.0
    %152 = vmatpush1.msra.mxu0 %v124
    %153 = vmatprep.subr.mxu0 0.0
    %154 = vmatpush1.msra.mxu0 %v125
    %155 = vmatprep.subr.mxu0 0.0
    %156 = vmatpush1.msra.mxu0 %v126
    %157 = vmatprep.subr.mxu0 0.0
    %158 = vmatpush1.msra.mxu0 %v127
    %159 = vmatprep.subr.mxu0 0.0
    %160 = vmatpush1.msra.mxu0 %v128
    %161 = vmatprep.subr.mxu0 0.0
    %162 = vmatpush1.msra.mxu0 0.0
    %163 = vmatprep.subr.mxu0 0.0
    %164 = vmatpush1.msra.mxu0 0.0
    %165 = vmatprep.subr.mxu0 0.0
    %166 = vmatpush1.msra.mxu0 0.0
    %167 = vmatprep.subr.mxu0 0.0
    %168 = vmatpush1.msra.mxu0 0.0
    %169 = vmatprep.subr.mxu0 0.0
    %170 = vmatpush1.msra.mxu0 0.0
    %171 = vmatprep.subr.mxu0 0.0
    %172 = vmatpush1.msra.mxu0 0.0
    %173 = vmatprep.subr.mxu0 0.0
    %174 = vmatpush1.msra.mxu0 0.0
    %175 = vmatprep.subr.mxu0 0.0
    %176 = vmatpush1.msra.mxu0 0.0
    %177 = vmatprep.subr.mxu0 0.0
    %178 = vmatpush1.msra.mxu0 0.0
    %179 = vmatprep.subr.mxu0 0.0
    %180 = vmatpush1.msra.mxu0 0.0
    %181 = vmatprep.subr.mxu0 0.0
    %182 = vmatpush1.msra.mxu0 0.0
    %183 = vmatprep.subr.mxu0 0.0
    %184 = vmatpush1.msra.mxu0 0.0
    %185 = vmatprep.subr.mxu0 0.0
    %186 = vmatpush1.msra.mxu0 0.0
    %187 = vmatprep.subr.mxu0 0.0
    %188 = vmatpush1.msra.mxu0 0.0
    %189 = vmatprep.subr.mxu0 0.0
    %190 = vmatpush1.msra.mxu0 0.0
    %191 = vmatprep.subr.mxu0 0.0
    %192 = vmatpush1.msra.mxu0 0.0
    %193 = vmatprep.mubr.f32.mxu0 0.0
    %194 = vmatmul.mubr.f32.gmra.mrb[0].mxu0 %v111
    %v195 = vpop.f32.mrb[0].mxu0
    %v196 = vadd.f32 0.0, %v195
    %v197 = vpop.f32.mrb[0].mxu0
    %198 = vmatprep.mubr.f32.mxu0 0.0
    %199 = vmatmul.mubr.f32.gmra.mrb[0].mxu0 %v112
    %v200 = vpop.f32.mrb[0].mxu0
    %v201 = vadd.f32 0.0, %v200
    %v202 = vpop.f32.mrb[0].mxu0
    %203 = vdwg.mxu0
    %v204 = vmax.f32 %v196, 0.0
    %v205 = vmax.f32 %v201, 0.0
    %v206 = vld [vmem:[%s3] sm:$0xff]
    %v207 = vld [vmem:[%s3 + $0x8] sm:$0xff]
    %v208 = vld [vmem:[%s3 + $0x10] sm:$0xff]
    %v209 = vld [vmem:[%s3 + $0x18] sm:$0xff]
    %v210 = vld [vmem:[%s3 + $0x20] sm:$0xff]
    %v211 = vld [vmem:[%s3 + $0x28] sm:$0xff]
    %v212 = vld [vmem:[%s3 + $0x30] sm:$0xff]
    %v213 = vld [vmem:[%s3 + $0x38] sm:$0xff]
    %v214 = vld [vmem:[%s3 + $0x40] sm:$0xff]
    %v215 = vld [vmem:[%s3 + $0x48] sm:$0xff]
    %v216 = vld [vmem:[%s3 + $0x50] sm:$0xff]
    %v217 = vld [vmem:[%s3 + $0x58] sm:$0xff]
    %v218 = vld [vmem:[%s3 + $0x60] sm:$0xff]
    %v219 = vld [vmem:[%s3 + $0x68] sm:$0xff]
    %v220 = vld [vmem:[%s3 + $0x70] sm:$0xff]
    %v221 = vld [vmem:[%s3 + $0x78] sm:$0xff]
    %222 = vmatprep.subr.mxu0 0.0
    %223 = vmatpush1.msra.mxu0 %v206
    %224 = vmatprep.subr.mxu0 0.0
    %225 = vmatpush1.msra.mxu0 %v207
    %226 = vmatprep.subr.mxu0 0.0
    %227 = vmatpush1.msra.mxu0 %v208
    %228 = vmatprep.subr.mxu0 0.0
    %229 = vmatpush1.msra.mxu0 %v209
    %230 = vmatprep.subr.mxu0 0.0
    %231 = vmatpush1.msra.mxu0 %v210
    %232 = vmatprep.subr.mxu0 0.0
    %233 = vmatpush1.msra.mxu0 %v211
    %234 = vmatprep.subr.mxu0 0.0
    %235 = vmatpush1.msra.mxu0 %v212
    %236 = vmatprep.subr.mxu0 0.0
    %237 = vmatpush1.msra.mxu0 %v213
    %238 = vmatprep.subr.mxu0 0.0
    %239 = vmatpush1.msra.mxu0 %v214
    %240 = vmatprep.subr.mxu0 0.0
    %241 = vmatpush1.msra.mxu0 %v215
    %242 = vmatprep.subr.mxu0 0.0
    %243 = vmatpush1.msra.mxu0 %v216
    %244 = vmatprep.subr.mxu0 0.0
    %245 = vmatpush1.msra.mxu0 %v217
    %246 = vmatprep.subr.mxu0 0.0
    %247 = vmatpush1.msra.mxu0 %v218
    %248 = vmatprep.subr.mxu0 0.0
    %249 = vmatpush1.msra.mxu0 %v219
    %250 = vmatprep.subr.mxu0 0.0
    %251 = vmatpush1.msra.mxu0 %v220
    %252 = vmatprep.subr.mxu0 0.0
    %253 = vmatpush1.msra.mxu0 %v221
    %254 = vmatprep.subr.mxu0 0.0
    %255 = vmatpush1.msra.mxu0 0.0
    %256 = vmatprep.subr.mxu0 0.0
    %257 = vmatpush1.msra.mxu0 0.0
    %258 = vmatprep.subr.mxu0 0.0
    %259 = vmatpush1.msra.mxu0 0.0
    %260 = vmatprep.subr.mxu0 0.0
    %261 = vmatpush1.msra.mxu0 0.0
    %262 = vmatprep.subr.mxu0 0.0
    %263 = vmatpush1.msra.mxu0 0.0
    %264 = vmatprep.subr.mxu0 0.0
    %265 = vmatpush1.msra.mxu0 0.0
    %266 = vmatprep.subr.mxu0 0.0
    %267 = vmatpush1.msra.mxu0 0.0
    %268 = vmatprep.subr.mxu0 0.0
    %269 = vmatpush1.msra.mxu0 0.0
    %270 = vmatprep.subr.mxu0 0.0
    %271 = vmatpush1.msra.mxu0 0.0
    %272 = vmatprep.subr.mxu0 0.0
    %273 = vmatpush1.msra.mxu0 0.0
    %274 = vmatprep.subr.mxu0 0.0
    %275 = vmatpush1.msra.mxu0 0.0
    %276 = vmatprep.subr.mxu0 0.0
    %277 = vmatpush1.msra.mxu0 0.0
    %278 = vmatprep.subr.mxu0 0.0
    %279 = vmatpush1.msra.mxu0 0.0
    %280 = vmatprep.subr.mxu0 0.0
    %281 = vmatpush1.msra.mxu0 0.0
    %282 = vmatprep.subr.mxu0 0.0
    %283 = vmatpush1.msra.mxu0 0.0
    %284 = vmatprep.subr.mxu0 0.0
    %285 = vmatpush1.msra.mxu0 0.0
    %286 = vmatprep.mubr.f32.mxu0 0.0
    %287 = vmatmul.mubr.f32.gmra.mrb[0].mxu0 %v204
    %v288 = vpop.f32.mrb[0].mxu0
    %v289 = vadd.f32 0.0, %v288
    %v290 = vpop.f32.mrb[0].mxu0
    %291 = vmatprep.mubr.f32.mxu0 0.0
    %292 = vmatmul.mubr.f32.gmra.mrb[0].mxu0 %v205
    %v293 = vpop.f32.mrb[0].mxu0
    %v294 = vadd.f32 0.0, %v293
    %v295 = vpop.f32.mrb[0].mxu0
    %296 = vdwg.mxu0
    %297 = vst [vmem:[#allocation2] sm:$0xff] %v289
    %298 = vst [vmem:[#allocation2 + $0x8] sm:$0xff] %v294
    // Predicated region
    $region18: #{mlp_forward.1} parent=1 // pred_check
      _
    $region19: #{mlp_forward.1} parent=1 // pred_check_branch
      %300 = sbr.rel (0) target = $region21
    $region20: #{mlp_forward.1} parent=1 // pred_region
      %s302 = ssub.s32 256, 256
      %303 = vsyncadd [#allocation3], %s302
      %s304 = sshll.u32 [#allocation2], 4
      %s305 = int_to_ptr.vmem [resolvable:$true] %s304
      %310 = dma.vmem_to_hbm [thread:$0]  %s305, 256, %s4, [#allocation3], 128, 128, 8
    $region21: #{mlp_forward.1} parent=1 // pred_fallthru
      _
    // Predicated region
    $region22: #{mlp_forward.1} parent=1 // pred_check
      _
    $region23: #{mlp_forward.1} parent=1 // pred_check_branch
      %312 = sbr.rel (0) target = $region25
    $region24: #{mlp_forward.1} parent=1 // pred_region
      %313 = dma.done [#allocation3], 256
    $region25: #{mlp_forward.1} parent=1 // pred_fallthru
      _
    %314 = vsyncpa [#allocation3], 1

</llo_original>
